<compile_context>
chip_gen: v7x
topology: tpu7x:2x2x1
jax: 0.10.0
libtpu: 0.0.40
codegen_flags: <defaults>
</compile_context>

<pallas_src>
import numpy as np

import jax
import jax.numpy as jnp
from jax.experimental import pallas as pl
from jax.experimental.pallas import tpu as pltpu

# ---- synthetic model dimensions (small, consistent with the forward) --------
B, C_IN, H, W = 2, 4, 16, 16          # input x: [2, 4, 16, 16] (NCHW)
K = 3                                  # conv kernel size (SAME padding)
HIDDEN = 32                            # backbone feature channels = projection_in_dim
PROJ_OUT = 16                          # projection_out_dim
PATCH = K * K * C_IN                   # im2col patch length = 36
HW = H * W                             # spatial positions per image = 256
NPOS = B * HW                          # total conv-output rows = 512 (% 8 == 0)
LANE = 128                             # lane-dense padded contraction / output width

assert NPOS % 8 == 0
assert PATCH + 1 <= LANE               # patch + bias column fit in one 128-lane tile


def _metric_kernel(lhs_ref, wconv_ref, pool_ref, wproj_ref, bproj_ref, out_ref):
    # lhs_ref   : (NPOS, LANE)    im2col patches, col PATCH == 1.0 (bias), rest 0
    # wconv_ref : (LANE, HIDDEN)  rows 0..PATCH-1 = conv weight, row PATCH = bias
    # pool_ref  : (B, NPOS)       block-diagonal average-pool matrix (1/HW)
    # wproj_ref : (HIDDEN, LANE)  projection weights, zero-padded to 128 lanes
    # bproj_ref : (1, LANE)       projection bias, zero-padded to 128 lanes
    # out_ref   : (B, LANE)

    # conv + bias as ONE fused MXU matmul (contraction depth 128), then ReLU.
    h = jnp.maximum(
        jnp.dot(lhs_ref[...], wconv_ref[...], preferred_element_type=jnp.float32),
        0.0)                                                  # (NPOS, HIDDEN)

    # global average pool as an MXU matmul (block-diagonal 1/HW weights).
    pooled = jnp.dot(pool_ref[...], h,
                     preferred_element_type=jnp.float32)      # (B, HIDDEN)

    # replaced head: Linear(projection_in_dim -> projection_out_dim), lane-padded.
    emb = jnp.dot(pooled, wproj_ref[...],
                  preferred_element_type=jnp.float32) + bproj_ref[...]
    out_ref[...] = emb.astype(out_ref.dtype)                  # one lane-dense store


def _build_pool():
    # (B, NPOS) average-pool matrix: 1/HW on each image's own 256 rows, else 0.
    pool = np.zeros((B, NPOS), np.float32)
    for b in range(B):
        pool[b, b * HW:(b + 1) * HW] = 1.0 / HW
    return jnp.asarray(pool)


def transform_metric_model(x_nchw, wconv, bconv, wproj, bproj):
    # ---- wrapper-side lane-dense im2col (tiny: ~256 KB of f32) ----------------
    x_nhwc = jnp.transpose(x_nchw, (0, 2, 3, 1)).astype(jnp.float32)   # (B, H, W, C)
    xp = jnp.pad(x_nhwc, ((0, 0), (1, 1), (1, 1), (0, 0)))             # SAME pad
    cols = [xp[:, dy:dy + H, dx:dx + W, :] for dy in range(K) for dx in range(K)]
    patches = jnp.concatenate(cols, axis=-1).reshape(NPOS, PATCH)      # (512, 36)

    # lane-pad the LHS to 128 and append a constant-1 column for the conv bias.
    lhs = jnp.zeros((NPOS, LANE), jnp.float32)
    lhs = lhs.at[:, :PATCH].set(patches).at[:, PATCH].set(1.0)         # (512, 128)

    # fused conv weight: rows 0..35 = wconv, row 36 = bconv, rest zero.
    w_fused = jnp.zeros((LANE, HIDDEN), jnp.float32)
    w_fused = w_fused.at[:PATCH, :].set(wconv).at[PATCH, :].set(bconv.reshape(HIDDEN))

    # lane-dense padded projection (unmasked 128-wide output stores).
    wproj_p = jnp.zeros((HIDDEN, LANE), jnp.float32).at[:, :PROJ_OUT].set(wproj)
    bproj_p = jnp.zeros((1, LANE), jnp.float32).at[:, :PROJ_OUT].set(
        bproj.reshape(1, PROJ_OUT))

    pool = _build_pool()                                               # (B, 512)

    out = pl.pallas_call(
        _metric_kernel,
        out_shape=jax.ShapeDtypeStruct((B, LANE), jnp.float32),
        grid_spec=pltpu.PrefetchScalarGridSpec(
            num_scalar_prefetch=0,
            grid=(1,),                          # single step on every chip gen
            in_specs=[
                pl.BlockSpec((NPOS, LANE), lambda i: (0, 0)),
                pl.BlockSpec((LANE, HIDDEN), lambda i: (0, 0)),
                pl.BlockSpec((B, NPOS), lambda i: (0, 0)),
                pl.BlockSpec((HIDDEN, LANE), lambda i: (0, 0)),
                pl.BlockSpec((1, LANE), lambda i: (0, 0)),
            ],
            out_specs=pl.BlockSpec((B, LANE), lambda i: (0, 0)),
        ),
        compiler_params=pltpu.CompilerParams(
            dimension_semantics=("arbitrary",)),
    )(lhs, w_fused, pool, wproj_p, bproj_p)

    # features.view(features.size(0), -1); drop the lane padding.
    return out[:, :PROJ_OUT]


def _reference(x_nchw, wconv, bconv, wproj, bproj):
    # Pure-JAX reference (explicit im2col) for correctness checking.
    x_nhwc = jnp.transpose(x_nchw, (0, 2, 3, 1)).astype(jnp.float32)
    xp = jnp.pad(x_nhwc, ((0, 0), (1, 1), (1, 1), (0, 0)))
    cols = []
    for dy in range(K):
        for dx in range(K):
            cols.append(xp[:, dy:dy + H, dx:dx + W, :])
    patches = jnp.concatenate(cols, axis=-1).reshape(B, HW, PATCH)
    h = jnp.maximum(jnp.einsum("bpk,kh->bph", patches, wconv) + bconv, 0.0)
    pooled = jnp.mean(h, axis=1)                                   # [B, HIDDEN]
    return pooled @ wproj + bproj                                  # [B, PROJ_OUT]


if __name__ == "__main__":
    key = jax.random.PRNGKey(0)
    kx, kwc, kbc, kwp, kbp = jax.random.split(key, 5)

    x = jax.random.normal(kx, (B, C_IN, H, W), dtype=jnp.float32)
    # deterministic synthetic parameters (no checkpoint load)
    wconv = jax.random.normal(kwc, (PATCH, HIDDEN), dtype=jnp.float32) * 0.05
    bconv = jax.random.normal(kbc, (1, HIDDEN), dtype=jnp.float32) * 0.01
    wproj = jax.random.normal(kwp, (HIDDEN, PROJ_OUT), dtype=jnp.float32) * 0.1
    bproj = jax.random.normal(kbp, (1, PROJ_OUT), dtype=jnp.float32) * 0.01

    fwd = jax.jit(transform_metric_model)
    out = jax.block_until_ready(fwd(x, wconv, bconv, wproj, bproj))

    ref = _reference(x, wconv, bconv, wproj, bproj)
    assert out.shape == (B, PROJ_OUT), out.shape
    assert jnp.allclose(out, ref, atol=1e-4, rtol=1e-4), "mismatch vs reference"
    print("KERNEL_OK")
</pallas_src>

<mosaic_0001>
module attributes {stable_mosaic.version = 11 : i64} {
  func.func @_metric_kernel(%arg0: i32, %arg1: memref<512x128xf32, #tpu.memory_space<vmem>>, %arg2: memref<128x32xf32, #tpu.memory_space<vmem>>, %arg3: memref<2x512xf32, #tpu.memory_space<vmem>>, %arg4: memref<32x128xf32, #tpu.memory_space<vmem>>, %arg5: memref<1x128xf32, #tpu.memory_space<vmem>>, %arg6: memref<2x128xf32, #tpu.memory_space<vmem>>) attributes {dimension_semantics = [#tpu.dimension_semantics<arbitrary>], iteration_bounds = array<i64: 1>, scalar_prefetch = 0 : i64, scratch_operands = 0 : i64, tpu.core_type = #tpu.core_type<tc>, window_params = [{pipeline_mode = #tpu.pipeline_mode<synchronous>, transform_indices = @transform_0, window_bounds = array<i64: 512, 128>}, {pipeline_mode = #tpu.pipeline_mode<synchronous>, transform_indices = @transform_1, window_bounds = array<i64: 128, 32>}, {pipeline_mode = #tpu.pipeline_mode<synchronous>, transform_indices = @transform_2, window_bounds = array<i64: 2, 512>}, {pipeline_mode = #tpu.pipeline_mode<synchronous>, transform_indices = @transform_3, window_bounds = array<i64: 32, 128>}, {pipeline_mode = #tpu.pipeline_mode<synchronous>, transform_indices = @transform_4, window_bounds = array<i64: 1, 128>}, {pipeline_mode = #tpu.pipeline_mode<synchronous>, transform_indices = @transform_5, window_bounds = array<i64: 2, 128>}]} {
    %c0 = arith.constant 0 : index
    %c0_0 = arith.constant 0 : index
    %0 = vector.load %arg1[%c0, %c0_0] : memref<512x128xf32, #tpu.memory_space<vmem>>, vector<512x128xf32>
    %c0_1 = arith.constant 0 : index
    %c0_2 = arith.constant 0 : index
    %1 = vector.load %arg2[%c0_1, %c0_2] : memref<128x32xf32, #tpu.memory_space<vmem>>, vector<128x32xf32>
    %cst = arith.constant dense<0.000000e+00> : vector<512x32xf32>
    %2 = tpu.matmul %0, %1, %cst {dimension_numbers = #tpu.dot_dimension_numbers<[1], [0], [0], [1], [0, 0, 1, 1], [], []>} : vector<512x128xf32>, vector<128x32xf32>, vector<512x32xf32> -> vector<512x32xf32>
    %cst_3 = arith.constant 0.000000e+00 : f32
    %3 = vector.broadcast %cst_3 : f32 to vector<512x32xf32>
    %4 = arith.maximumf %2, %3 : vector<512x32xf32>
    %c0_4 = arith.constant 0 : index
    %c0_5 = arith.constant 0 : index
    %5 = vector.load %arg3[%c0_4, %c0_5] : memref<2x512xf32, #tpu.memory_space<vmem>>, vector<2x512xf32>
    %cst_6 = arith.constant dense<0.000000e+00> : vector<2x32xf32>
    %6 = tpu.matmul %5, %4, %cst_6 {dimension_numbers = #tpu.dot_dimension_numbers<[1], [0], [0], [1], [0, 0, 1, 1], [], []>} : vector<2x512xf32>, vector<512x32xf32>, vector<2x32xf32> -> vector<2x32xf32>
    %c0_7 = arith.constant 0 : index
    %c0_8 = arith.constant 0 : index
    %7 = vector.load %arg4[%c0_7, %c0_8] : memref<32x128xf32, #tpu.memory_space<vmem>>, vector<32x128xf32>
    %cst_9 = arith.constant dense<0.000000e+00> : vector<2x128xf32>
    %8 = tpu.matmul %6, %7, %cst_9 {dimension_numbers = #tpu.dot_dimension_numbers<[1], [0], [0], [1], [0, 0, 1, 1], [], []>} : vector<2x32xf32>, vector<32x128xf32>, vector<2x128xf32> -> vector<2x128xf32>
    %c0_10 = arith.constant 0 : index
    %c0_11 = arith.constant 0 : index
    %9 = vector.load %arg5[%c0_10, %c0_11] : memref<1x128xf32, #tpu.memory_space<vmem>>, vector<1x128xf32>
    %10 = vector.broadcast %9 : vector<1x128xf32> to vector<2x128xf32>
    %11 = arith.addf %8, %10 : vector<2x128xf32>
    %c0_12 = arith.constant 0 : index
    %c0_13 = arith.constant 0 : index
    %12 = vector.load %arg6[%c0_12, %c0_13] : memref<2x128xf32, #tpu.memory_space<vmem>>, vector<2x128xf32>
    tpu.vector_store %arg6[%c0_12, %c0_13], %11 {strides = array<i32>} : memref<2x128xf32, #tpu.memory_space<vmem>>, vector<2x128xf32>,
    return
  }
  func.func @transform_0(%arg0: i32) -> (i32, i32) {
    %c0_i32 = arith.constant 0 : i32
    %c0_i32_0 = arith.constant 0 : i32
    %c0_i32_1 = arith.constant 0 : i32
    return %c0_i32, %c0_i32_0 : i32, i32
  }
  func.func @transform_1(%arg0: i32) -> (i32, i32) {
    %c0_i32 = arith.constant 0 : i32
    %c0_i32_0 = arith.constant 0 : i32
    %c0_i32_1 = arith.constant 0 : i32
    return %c0_i32, %c0_i32_0 : i32, i32
  }
  func.func @transform_2(%arg0: i32) -> (i32, i32) {
    %c0_i32 = arith.constant 0 : i32
    %c0_i32_0 = arith.constant 0 : i32
    %c0_i32_1 = arith.constant 0 : i32
    return %c0_i32, %c0_i32_0 : i32, i32
  }
  func.func @transform_3(%arg0: i32) -> (i32, i32) {
    %c0_i32 = arith.constant 0 : i32
    %c0_i32_0 = arith.constant 0 : i32
    %c0_i32_1 = arith.constant 0 : i32
    return %c0_i32, %c0_i32_0 : i32, i32
  }
  func.func @transform_4(%arg0: i32) -> (i32, i32) {
    %c0_i32 = arith.constant 0 : i32
    %c0_i32_0 = arith.constant 0 : i32
    %c0_i32_1 = arith.constant 0 : i32
    return %c0_i32, %c0_i32_0 : i32, i32
  }
  func.func @transform_5(%arg0: i32) -> (i32, i32) {
    %c0_i32 = arith.constant 0 : i32
    %c0_i32_0 = arith.constant 0 : i32
    %c0_i32_1 = arith.constant 0 : i32
    return %c0_i32, %c0_i32_0 : i32, i32
  }
}

</mosaic_0001>

<llo_original>
// kernel: transform_metric_model.1
$region0: #{transform_metric_model.1}
  #allocation0 [shape = 'u32[]', space=smem, size = 0x4, offset = 0x4, fixed_abs, tag = 'smem constant byte address 0x4 - core index']
  #allocation1 [shape = 'u32[144,128]{1,0:T(1,128)}', space=vmem, size = 0x12000, scoped, tag = 'internal scratch']
  %s0 = inlined_call_operand.vmem [shape: f32[512,128], index: 0, kind: input, shape index: {}]
  %s1 = inlined_call_operand.vmem [shape: f32[128,32], index: 1, kind: input, shape index: {}]
  %s2 = inlined_call_operand.vmem [shape: f32[2,512], index: 2, kind: input, shape index: {}]
  %s3 = inlined_call_operand.vmem [shape: f32[32,128], index: 3, kind: input, shape index: {}]
  %s4 = inlined_call_operand.vmem [shape: f32[1,128], index: 4, kind: input, shape index: {}]
  %s5 = inlined_call_operand.hbm [shape: f32[2,128], index: 5, kind: output, shape index: {}]
  %s6 = sld [smem:[#allocation0]]
  $region30: #{transform_metric_model.1} parent=0
    _
  %s8 = ssub.s32 1, %s6
  %s9 = scalar_select 0, %s8, %s6
  $region1: #{transform_metric_model.1} parent=0
    #allocation2 [shape = 'u8[1024]{0}', space=vmem, size = 0x400, scoped, tag = 'output window, operand 0, single buffered']
    #allocation3 [shape = 's32[1]{0}', space=sflag, size = 0x4, scoped, tag = 'scoped memory for transform_metric_model.1']
    %10 = vsyncpa [#allocation3], 0
    // Predicated region
    $region2: #{transform_metric_model.1} parent=1 // pred_check
      _
    $region3: #{transform_metric_model.1} parent=1 // pred_check_branch
      %12 = sbr.rel (0) target = $region5
    $region4: #{transform_metric_model.1} parent=1 // pred_region
      _
    $region5: #{transform_metric_model.1} parent=1 // pred_fallthru
      _
    // Predicated region
    $region6: #{transform_metric_model.1} parent=1 // pred_check
      _
    $region7: #{transform_metric_model.1} parent=1 // pred_check_branch
      %14 = sbr.rel (0) target = $region9
    $region8: #{transform_metric_model.1} parent=1 // pred_region
      _
    $region9: #{transform_metric_model.1} parent=1 // pred_fallthru
      _
    // Predicated region
    $region10: #{transform_metric_model.1} parent=1 // pred_check
      _
    $region11: #{transform_metric_model.1} parent=1 // pred_check_branch
      %16 = sbr.rel (0) target = $region13
    $region12: #{transform_metric_model.1} parent=1 // pred_region
      _
    $region13: #{transform_metric_model.1} parent=1 // pred_fallthru
      _
    // Predicated region
    $region14: #{transform_metric_model.1} parent=1 // pred_check
      _
    $region15: #{transform_metric_model.1} parent=1 // pred_check_branch
      %18 = sbr.rel (0) target = $region17
    $region16: #{transform_metric_model.1} parent=1 // pred_region
      _
    $region17: #{transform_metric_model.1} parent=1 // pred_fallthru
      _
    // Predicated region
    $region18: #{transform_metric_model.1} parent=1 // pred_check
      _
    $region19: #{transform_metric_model.1} parent=1 // pred_check_branch
      %20 = sbr.rel (0) target = $region21
    $region20: #{transform_metric_model.1} parent=1 // pred_region
      _
    $region21: #{transform_metric_model.1} parent=1 // pred_fallthru
      _
    %v21 = vld [vmem:[%s0] sm:$0xff]
    %v22 = vld [vmem:[%s0 + $0x8] sm:$0xff]
    %v23 = vld [vmem:[%s0 + $0x10] sm:$0xff]
    %v24 = vld [vmem:[%s0 + $0x18] sm:$0xff]
    %v25 = vld [vmem:[%s0 + $0x20] sm:$0xff]
    %v26 = vld [vmem:[%s0 + $0x28] sm:$0xff]
    %v27 = vld [vmem:[%s0 + $0x30] sm:$0xff]
    %v28 = vld [vmem:[%s0 + $0x38] sm:$0xff]
    %v29 = vld [vmem:[%s0 + $0x40] sm:$0xff]
    %v30 = vld [vmem:[%s0 + $0x48] sm:$0xff]
    %v31 = vld [vmem:[%s0 + $0x50] sm:$0xff]
    %v32 = vld [vmem:[%s0 + $0x58] sm:$0xff]
    %v33 = vld [vmem:[%s0 + $0x60] sm:$0xff]
    %v34 = vld [vmem:[%s0 + $0x68] sm:$0xff]
    %v35 = vld [vmem:[%s0 + $0x70] sm:$0xff]
    %v36 = vld [vmem:[%s0 + $0x78] sm:$0xff]
    %v37 = vld [vmem:[%s0 + $0x80] sm:$0xff]
    %v38 = vld [vmem:[%s0 + $0x88] sm:$0xff]
    %v39 = vld [vmem:[%s0 + $0x90] sm:$0xff]
    %v40 = vld [vmem:[%s0 + $0x98] sm:$0xff]
    %v41 = vld [vmem:[%s0 + $0xa0] sm:$0xff]
    %v42 = vld [vmem:[%s0 + $0xa8] sm:$0xff]
    %v43 = vld [vmem:[%s0 + $0xb0] sm:$0xff]
    %v44 = vld [vmem:[%s0 + $0xb8] sm:$0xff]
    %v45 = vld [vmem:[%s0 + $0xc0] sm:$0xff]
    %v46 = vld [vmem:[%s0 + $0xc8] sm:$0xff]
    %v47 = vld [vmem:[%s0 + $0xd0] sm:$0xff]
    %v48 = vld [vmem:[%s0 + $0xd8] sm:$0xff]
    %v49 = vld [vmem:[%s0 + $0xe0] sm:$0xff]
    %v50 = vld [vmem:[%s0 + $0xe8] sm:$0xff]
    %v51 = vld [vmem:[%s0 + $0xf0] sm:$0xff]
    %v52 = vld [vmem:[%s0 + $0xf8] sm:$0xff]
    %v53 = vld [vmem:[%s0 + $0x100] sm:$0xff]
    %v54 = vld [vmem:[%s0 + $0x108] sm:$0xff]
    %v55 = vld [vmem:[%s0 + $0x110] sm:$0xff]
    %v56 = vld [vmem:[%s0 + $0x118] sm:$0xff]
    %v57 = vld [vmem:[%s0 + $0x120] sm:$0xff]
    %v58 = vld [vmem:[%s0 + $0x128] sm:$0xff]
    %v59 = vld [vmem:[%s0 + $0x130] sm:$0xff]
    %v60 = vld [vmem:[%s0 + $0x138] sm:$0xff]
    %v61 = vld [vmem:[%s0 + $0x140] sm:$0xff]
    %v62 = vld [vmem:[%s0 + $0x148] sm:$0xff]
    %v63 = vld [vmem:[%s0 + $0x150] sm:$0xff]
    %v64 = vld [vmem:[%s0 + $0x158] sm:$0xff]
    %v65 = vld [vmem:[%s0 + $0x160] sm:$0xff]
    %v66 = vld [vmem:[%s0 + $0x168] sm:$0xff]
    %v67 = vld [vmem:[%s0 + $0x170] sm:$0xff]
    %v68 = vld [vmem:[%s0 + $0x178] sm:$0xff]
    %v69 = vld [vmem:[%s0 + $0x180] sm:$0xff]
    %v70 = vld [vmem:[%s0 + $0x188] sm:$0xff]
    %v71 = vld [vmem:[%s0 + $0x190] sm:$0xff]
    %v72 = vld [vmem:[%s0 + $0x198] sm:$0xff]
    %v73 = vld [vmem:[%s0 + $0x1a0] sm:$0xff]
    %v74 = vld [vmem:[%s0 + $0x1a8] sm:$0xff]
    %v75 = vld [vmem:[%s0 + $0x1b0] sm:$0xff]
    %v76 = vld [vmem:[%s0 + $0x1b8] sm:$0xff]
    %v77 = vld [vmem:[%s0 + $0x1c0] sm:$0xff]
    %v78 = vld [vmem:[%s0 + $0x1c8] sm:$0xff]
    %v79 = vld [vmem:[%s0 + $0x1d0] sm:$0xff]
    %v80 = vld [vmem:[%s0 + $0x1d8] sm:$0xff]
    %v81 = vld [vmem:[%s0 + $0x1e0] sm:$0xff]
    %v82 = vld [vmem:[%s0 + $0x1e8] sm:$0xff]
    %v83 = vld [vmem:[%s0 + $0x1f0] sm:$0xff]
    %v84 = vld [vmem:[%s0 + $0x1f8] sm:$0xff]
    %v85 = vld [vmem:[%s1] sm:$0xff]
    %v86 = vld [vmem:[%s1 + $0x8] sm:$0xff]
    %v87 = vld [vmem:[%s1 + $0x10] sm:$0xff]
    %v88 = vld [vmem:[%s1 + $0x18] sm:$0xff]
    %v89 = vld [vmem:[%s1 + $0x20] sm:$0xff]
    %v90 = vld [vmem:[%s1 + $0x28] sm:$0xff]
    %v91 = vld [vmem:[%s1 + $0x30] sm:$0xff]
    %v92 = vld [vmem:[%s1 + $0x38] sm:$0xff]
    %v93 = vld [vmem:[%s1 + $0x40] sm:$0xff]
    %v94 = vld [vmem:[%s1 + $0x48] sm:$0xff]
    %v95 = vld [vmem:[%s1 + $0x50] sm:$0xff]
    %v96 = vld [vmem:[%s1 + $0x58] sm:$0xff]
    %v97 = vld [vmem:[%s1 + $0x60] sm:$0xff]
    %v98 = vld [vmem:[%s1 + $0x68] sm:$0xff]
    %v99 = vld [vmem:[%s1 + $0x70] sm:$0xff]
    %v100 = vld [vmem:[%s1 + $0x78] sm:$0xff]
    %101 = vmatprep.subr.mxu0 0.0
    %102 = vmatpush1.msra.mxu0 %v85
    %103 = vmatprep.subr.mxu0 0.0
    %104 = vmatpush1.msra.mxu0 %v86
    %105 = vmatprep.subr.mxu0 0.0
    %106 = vmatpush1.msra.mxu0 %v87
    %107 = vmatprep.subr.mxu0 0.0
    %108 = vmatpush1.msra.mxu0 %v88
    %109 = vmatprep.subr.mxu0 0.0
    %110 = vmatpush1.msra.mxu0 %v89
    %111 = vmatprep.subr.mxu0 0.0
    %112 = vmatpush1.msra.mxu0 %v90
    %113 = vmatprep.subr.mxu0 0.0
    %114 = vmatpush1.msra.mxu0 %v91
    %115 = vmatprep.subr.mxu0 0.0
    %116 = vmatpush1.msra.mxu0 %v92
    %117 = vmatprep.subr.mxu0 0.0
    %118 = vmatpush1.msra.mxu0 %v93
    %119 = vmatprep.subr.mxu0 0.0
    %120 = vmatpush1.msra.mxu0 %v94
    %121 = vmatprep.subr.mxu0 0.0
    %122 = vmatpush1.msra.mxu0 %v95
    %123 = vmatprep.subr.mxu0 0.0
    %124 = vmatpush1.msra.mxu0 %v96
    %125 = vmatprep.subr.mxu0 0.0
    %126 = vmatpush1.msra.mxu0 %v97
    %127 = vmatprep.subr.mxu0 0.0
    %128 = vmatpush1.msra.mxu0 %v98
    %129 = vmatprep.subr.mxu0 0.0
    %130 = vmatpush1.msra.mxu0 %v99
    %131 = vmatprep.subr.mxu0 0.0
    %132 = vmatpush1.msra.mxu0 %v100
    %133 = vmatprep.subr.mxu0 0.0
    %134 = vmatpush1.msra.mxu0 0.0
    %135 = vmatprep.subr.mxu0 0.0
    %136 = vmatpush1.msra.mxu0 0.0
    %137 = vmatprep.subr.mxu0 0.0
    %138 = vmatpush1.msra.mxu0 0.0
    %139 = vmatprep.subr.mxu0 0.0
    %140 = vmatpush1.msra.mxu0 0.0
    %141 = vmatprep.subr.mxu0 0.0
    %142 = vmatpush1.msra.mxu0 0.0
    %143 = vmatprep.subr.mxu0 0.0
    %144 = vmatpush1.msra.mxu0 0.0
    %145 = vmatprep.subr.mxu0 0.0
    %146 = vmatpush1.msra.mxu0 0.0
    %147 = vmatprep.subr.mxu0 0.0
    %148 = vmatpush1.msra.mxu0 0.0
    %149 = vmatprep.subr.mxu0 0.0
    %150 = vmatpush1.msra.mxu0 0.0
    %151 = vmatprep.subr.mxu0 0.0
    %152 = vmatpush1.msra.mxu0 0.0
    %153 = vmatprep.subr.mxu0 0.0
    %154 = vmatpush1.msra.mxu0 0.0
    %155 = vmatprep.subr.mxu0 0.0
    %156 = vmatpush1.msra.mxu0 0.0
    %157 = vmatprep.subr.mxu0 0.0
    %158 = vmatpush1.msra.mxu0 0.0
    %159 = vmatprep.subr.mxu0 0.0
    %160 = vmatpush1.msra.mxu0 0.0
    %161 = vmatprep.subr.mxu0 0.0
    %162 = vmatpush1.msra.mxu0 0.0
    %163 = vmatprep.subr.mxu0 0.0
    %164 = vmatpush1.msra.mxu0 0.0
    %165 = vmatprep.mubr.f32.mxu0 0.0
    %166 = vmatmul.mubr.f32.gmra.mrb[0].mxu0 %v21
    %v167 = vpop.f32.mrb[0].mxu0
    %v168 = vadd.f32 0.0, %v167
    %v169 = vpop.f32.mrb[0].mxu0
    %170 = vmatprep.mubr.f32.mxu0 0.0
    %171 = vmatmul.mubr.f32.gmra.mrb[0].mxu0 %v22
    %v172 = vpop.f32.mrb[0].mxu0
    %v173 = vadd.f32 0.0, %v172
    %v174 = vpop.f32.mrb[0].mxu0
    %175 = vmatprep.mubr.f32.mxu0 0.0
    %176 = vmatmul.mubr.f32.gmra.mrb[0].mxu0 %v23
    %v177 = vpop.f32.mrb[0].mxu0
    %v178 = vadd.f32 0.0, %v177
    %v179 = vpop.f32.mrb[0].mxu0
    %180 = vmatprep.mubr.f32.mxu0 0.0
    %181 = vmatmul.mubr.f32.gmra.mrb[0].mxu0 %v24
    %v182 = vpop.f32.mrb[0].mxu0
    %v183 = vadd.f32 0.0, %v182
    %v184 = vpop.f32.mrb[0].mxu0
    %185 = vmatprep.mubr.f32.mxu0 0.0
    %186 = vmatmul.mubr.f32.gmra.mrb[0].mxu0 %v25
    %v187 = vpop.f32.mrb[0].mxu0
    %v188 = vadd.f32 0.0, %v187
    %v189 = vpop.f32.mrb[0].mxu0
    %190 = vmatprep.mubr.f32.mxu0 0.0
    %191 = vmatmul.mubr.f32.gmra.mrb[0].mxu0 %v26
    %v192 = vpop.f32.mrb[0].mxu0
    %v193 = vadd.f32 0.0, %v192
    %v194 = vpop.f32.mrb[0].mxu0
    %195 = vmatprep.mubr.f32.mxu0 0.0
    %196 = vmatmul.mubr.f32.gmra.mrb[0].mxu0 %v27
    %v197 = vpop.f32.mrb[0].mxu0
    %v198 = vadd.f32 0.0, %v197
    %v199 = vpop.f32.mrb[0].mxu0
    %200 = vmatprep.mubr.f32.mxu0 0.0
    %201 = vmatmul.mubr.f32.gmra.mrb[0].mxu0 %v28
    %v202 = vpop.f32.mrb[0].mxu0
    %v203 = vadd.f32 0.0, %v202
    %v204 = vpop.f32.mrb[0].mxu0
    %205 = vmatprep.mubr.f32.mxu0 0.0
    %206 = vmatmul.mubr.f32.gmra.mrb[0].mxu0 %v29
    %v207 = vpop.f32.mrb[0].mxu0
    %v208 = vadd.f32 0.0, %v207
    %v209 = vpop.f32.mrb[0].mxu0
    %210 = vmatprep.mubr.f32.mxu0 0.0
    %211 = vmatmul.mubr.f32.gmra.mrb[0].mxu0 %v30
    %v212 = vpop.f32.mrb[0].mxu0
    %v213 = vadd.f32 0.0, %v212
    %v214 = vpop.f32.mrb[0].mxu0
    %215 = vmatprep.mubr.f32.mxu0 0.0
    %216 = vmatmul.mubr.f32.gmra.mrb[0].mxu0 %v31
    %v217 = vpop.f32.mrb[0].mxu0
    %v218 = vadd.f32 0.0, %v217
    %v219 = vpop.f32.mrb[0].mxu0
    %220 = vmatprep.mubr.f32.mxu0 0.0
    %221 = vmatmul.mubr.f32.gmra.mrb[0].mxu0 %v32
    %v222 = vpop.f32.mrb[0].mxu0
    %v223 = vadd.f32 0.0, %v222
    %v224 = vpop.f32.mrb[0].mxu0
    %225 = vmatprep.mubr.f32.mxu0 0.0
    %226 = vmatmul.mubr.f32.gmra.mrb[0].mxu0 %v33
    %v227 = vpop.f32.mrb[0].mxu0
    %v228 = vadd.f32 0.0, %v227
    %v229 = vpop.f32.mrb[0].mxu0
    %230 = vmatprep.mubr.f32.mxu0 0.0
    %231 = vmatmul.mubr.f32.gmra.mrb[0].mxu0 %v34
    %v232 = vpop.f32.mrb[0].mxu0
    %v233 = vadd.f32 0.0, %v232
    %v234 = vpop.f32.mrb[0].mxu0
    %235 = vmatprep.mubr.f32.mxu0 0.0
    %236 = vmatmul.mubr.f32.gmra.mrb[0].mxu0 %v35
    %v237 = vpop.f32.mrb[0].mxu0
    %v238 = vadd.f32 0.0, %v237
    %v239 = vpop.f32.mrb[0].mxu0
    %240 = vmatprep.mubr.f32.mxu0 0.0
    %241 = vmatmul.mubr.f32.gmra.mrb[0].mxu0 %v36
    %v242 = vpop.f32.mrb[0].mxu0
    %v243 = vadd.f32 0.0, %v242
    %v244 = vpop.f32.mrb[0].mxu0
    %245 = vmatprep.mubr.f32.mxu0 0.0
    %246 = vmatmul.mubr.f32.gmra.mrb[0].mxu0 %v37
    %v247 = vpop.f32.mrb[0].mxu0
    %v248 = vadd.f32 0.0, %v247
    %v249 = vpop.f32.mrb[0].mxu0
    %250 = vmatprep.mubr.f32.mxu0 0.0
    %251 = vmatmul.mubr.f32.gmra.mrb[0].mxu0 %v38
    %v252 = vpop.f32.mrb[0].mxu0
    %v253 = vadd.f32 0.0, %v252
    %v254 = vpop.f32.mrb[0].mxu0
    %255 = vmatprep.mubr.f32.mxu0 0.0
    %256 = vmatmul.mubr.f32.gmra.mrb[0].mxu0 %v39
    %v257 = vpop.f32.mrb[0].mxu0
    %v258 = vadd.f32 0.0, %v257
    %v259 = vpop.f32.mrb[0].mxu0
    %260 = vmatprep.mubr.f32.mxu0 0.0
    %261 = vmatmul.mubr.f32.gmra.mrb[0].mxu0 %v40
    %v262 = vpop.f32.mrb[0].mxu0
    %v263 = vadd.f32 0.0, %v262
    %v264 = vpop.f32.mrb[0].mxu0
    %265 = vmatprep.mubr.f32.mxu0 0.0
    %266 = vmatmul.mubr.f32.gmra.mrb[0].mxu0 %v41
    %v267 = vpop.f32.mrb[0].mxu0
    %v268 = vadd.f32 0.0, %v267
    %v269 = vpop.f32.mrb[0].mxu0
    %270 = vmatprep.mubr.f32.mxu0 0.0
    %271 = vmatmul.mubr.f32.gmra.mrb[0].mxu0 %v42
    %v272 = vpop.f32.mrb[0].mxu0
    %v273 = vadd.f32 0.0, %v272
    %v274 = vpop.f32.mrb[0].mxu0
    %275 = vmatprep.mubr.f32.mxu0 0.0
    %276 = vmatmul.mubr.f32.gmra.mrb[0].mxu0 %v43
    %v277 = vpop.f32.mrb[0].mxu0
    %v278 = vadd.f32 0.0, %v277
    %v279 = vpop.f32.mrb[0].mxu0
    %280 = vmatprep.mubr.f32.mxu0 0.0
    %281 = vmatmul.mubr.f32.gmra.mrb[0].mxu0 %v44
    %v282 = vpop.f32.mrb[0].mxu0
    %v283 = vadd.f32 0.0, %v282
    %v284 = vpop.f32.mrb[0].mxu0
    %285 = vmatprep.mubr.f32.mxu0 0.0
    %286 = vmatmul.mubr.f32.gmra.mrb[0].mxu0 %v45
    %v287 = vpop.f32.mrb[0].mxu0
    %v288 = vadd.f32 0.0, %v287
    %v289 = vpop.f32.mrb[0].mxu0
    %290 = vmatprep.mubr.f32.mxu0 0.0
    %291 = vmatmul.mubr.f32.gmra.mrb[0].mxu0 %v46
    %v292 = vpop.f32.mrb[0].mxu0
    %v293 = vadd.f32 0.0, %v292
    %v294 = vpop.f32.mrb[0].mxu0
    %295 = vmatprep.mubr.f32.mxu0 0.0
    %296 = vmatmul.mubr.f32.gmra.mrb[0].mxu0 %v47
    %v297 = vpop.f32.mrb[0].mxu0
    %v298 = vadd.f32 0.0, %v297
    %v299 = vpop.f32.mrb[0].mxu0
    %300 = vmatprep.mubr.f32.mxu0 0.0
    %301 = vmatmul.mubr.f32.gmra.mrb[0].mxu0 %v48
    %v302 = vpop.f32.mrb[0].mxu0
    %v303 = vadd.f32 0.0, %v302
    %v304 = vpop.f32.mrb[0].mxu0
    %305 = vmatprep.mubr.f32.mxu0 0.0
    %306 = vmatmul.mubr.f32.gmra.mrb[0].mxu0 %v49
    %v307 = vpop.f32.mrb[0].mxu0
    %v308 = vadd.f32 0.0, %v307
    %v309 = vpop.f32.mrb[0].mxu0
    %310 = vmatprep.mubr.f32.mxu0 0.0
    %311 = vmatmul.mubr.f32.gmra.mrb[0].mxu0 %v50
    %v312 = vpop.f32.mrb[0].mxu0
    %v313 = vadd.f32 0.0, %v312
    %v314 = vpop.f32.mrb[0].mxu0
    %315 = vmatprep.mubr.f32.mxu0 0.0
    %316 = vmatmul.mubr.f32.gmra.mrb[0].mxu0 %v51
    %v317 = vpop.f32.mrb[0].mxu0
    %v318 = vadd.f32 0.0, %v317
    %v319 = vpop.f32.mrb[0].mxu0
    %320 = vmatprep.mubr.f32.mxu0 0.0
    %321 = vmatmul.mubr.f32.gmra.mrb[0].mxu0 %v52
    %v322 = vpop.f32.mrb[0].mxu0
    %v323 = vadd.f32 0.0, %v322
    %v324 = vpop.f32.mrb[0].mxu0
    %325 = vmatprep.mubr.f32.mxu0 0.0
    %326 = vmatmul.mubr.f32.gmra.mrb[0].mxu0 %v53
    %v327 = vpop.f32.mrb[0].mxu0
    %v328 = vadd.f32 0.0, %v327
    %v329 = vpop.f32.mrb[0].mxu0
    %330 = vmatprep.mubr.f32.mxu0 0.0
    %331 = vmatmul.mubr.f32.gmra.mrb[0].mxu0 %v54
    %v332 = vpop.f32.mrb[0].mxu0
    %v333 = vadd.f32 0.0, %v332
    %v334 = vpop.f32.mrb[0].mxu0
    %335 = vmatprep.mubr.f32.mxu0 0.0
    %336 = vmatmul.mubr.f32.gmra.mrb[0].mxu0 %v55
    %v337 = vpop.f32.mrb[0].mxu0
    %v338 = vadd.f32 0.0, %v337
    %v339 = vpop.f32.mrb[0].mxu0
    %340 = vmatprep.mubr.f32.mxu0 0.0
    %341 = vmatmul.mubr.f32.gmra.mrb[0].mxu0 %v56
    %v342 = vpop.f32.mrb[0].mxu0
    %v343 = vadd.f32 0.0, %v342
    %v344 = vpop.f32.mrb[0].mxu0
    %345 = vmatprep.mubr.f32.mxu0 0.0
    %346 = vmatmul.mubr.f32.gmra.mrb[0].mxu0 %v57
    %v347 = vpop.f32.mrb[0].mxu0
    %v348 = vadd.f32 0.0, %v347
    %v349 = vpop.f32.mrb[0].mxu0
    %350 = vmatprep.mubr.f32.mxu0 0.0
    %351 = vmatmul.mubr.f32.gmra.mrb[0].mxu0 %v58
    %v352 = vpop.f32.mrb[0].mxu0
    %v353 = vadd.f32 0.0, %v352
    %v354 = vpop.f32.mrb[0].mxu0
    %355 = vmatprep.mubr.f32.mxu0 0.0
    %356 = vmatmul.mubr.f32.gmra.mrb[0].mxu0 %v59
    %v357 = vpop.f32.mrb[0].mxu0
    %v358 = vadd.f32 0.0, %v357
    %v359 = vpop.f32.mrb[0].mxu0
    %360 = vmatprep.mubr.f32.mxu0 0.0
    %361 = vmatmul.mubr.f32.gmra.mrb[0].mxu0 %v60
    %v362 = vpop.f32.mrb[0].mxu0
    %v363 = vadd.f32 0.0, %v362
    %v364 = vpop.f32.mrb[0].mxu0
    %365 = vmatprep.mubr.f32.mxu0 0.0
    %366 = vmatmul.mubr.f32.gmra.mrb[0].mxu0 %v61
    %v367 = vpop.f32.mrb[0].mxu0
    %v368 = vadd.f32 0.0, %v367
    %v369 = vpop.f32.mrb[0].mxu0
    %370 = vmatprep.mubr.f32.mxu0 0.0
    %371 = vmatmul.mubr.f32.gmra.mrb[0].mxu0 %v62
    %v372 = vpop.f32.mrb[0].mxu0
    %v373 = vadd.f32 0.0, %v372
    %v374 = vpop.f32.mrb[0].mxu0
    %375 = vmatprep.mubr.f32.mxu0 0.0
    %376 = vmatmul.mubr.f32.gmra.mrb[0].mxu0 %v63
    %v377 = vpop.f32.mrb[0].mxu0
    %v378 = vadd.f32 0.0, %v377
    %v379 = vpop.f32.mrb[0].mxu0
    %380 = vmatprep.mubr.f32.mxu0 0.0
    %381 = vmatmul.mubr.f32.gmra.mrb[0].mxu0 %v64
    %v382 = vpop.f32.mrb[0].mxu0
    %v383 = vadd.f32 0.0, %v382
    %v384 = vpop.f32.mrb[0].mxu0
    %385 = vmatprep.mubr.f32.mxu0 0.0
    %386 = vmatmul.mubr.f32.gmra.mrb[0].mxu0 %v65
    %v387 = vpop.f32.mrb[0].mxu0
    %v388 = vadd.f32 0.0, %v387
    %v389 = vpop.f32.mrb[0].mxu0
    %390 = vmatprep.mubr.f32.mxu0 0.0
    %391 = vmatmul.mubr.f32.gmra.mrb[0].mxu0 %v66
    %v392 = vpop.f32.mrb[0].mxu0
    %v393 = vadd.f32 0.0, %v392
    %v394 = vpop.f32.mrb[0].mxu0
    %395 = vmatprep.mubr.f32.mxu0 0.0
    %396 = vmatmul.mubr.f32.gmra.mrb[0].mxu0 %v67
    %v397 = vpop.f32.mrb[0].mxu0
    %v398 = vadd.f32 0.0, %v397
    %v399 = vpop.f32.mrb[0].mxu0
    %400 = vmatprep.mubr.f32.mxu0 0.0
    %401 = vmatmul.mubr.f32.gmra.mrb[0].mxu0 %v68
    %v402 = vpop.f32.mrb[0].mxu0
    %v403 = vadd.f32 0.0, %v402
    %v404 = vpop.f32.mrb[0].mxu0
    %405 = vmatprep.mubr.f32.mxu0 0.0
    %406 = vmatmul.mubr.f32.gmra.mrb[0].mxu0 %v69
    %v407 = vpop.f32.mrb[0].mxu0
    %v408 = vadd.f32 0.0, %v407
    %v409 = vpop.f32.mrb[0].mxu0
    %410 = vmatprep.mubr.f32.mxu0 0.0
    %411 = vmatmul.mubr.f32.gmra.mrb[0].mxu0 %v70
    %v412 = vpop.f32.mrb[0].mxu0
    %v413 = vadd.f32 0.0, %v412
    %v414 = vpop.f32.mrb[0].mxu0
    %415 = vmatprep.mubr.f32.mxu0 0.0
    %416 = vmatmul.mubr.f32.gmra.mrb[0].mxu0 %v71
    %v417 = vpop.f32.mrb[0].mxu0
    %v418 = vadd.f32 0.0, %v417
    %v419 = vpop.f32.mrb[0].mxu0
    %420 = vmatprep.mubr.f32.mxu0 0.0
    %421 = vmatmul.mubr.f32.gmra.mrb[0].mxu0 %v72
    %v422 = vpop.f32.mrb[0].mxu0
    %v423 = vadd.f32 0.0, %v422
    %v424 = vpop.f32.mrb[0].mxu0
    %425 = vmatprep.mubr.f32.mxu0 0.0
    %426 = vmatmul.mubr.f32.gmra.mrb[0].mxu0 %v73
    %v427 = vpop.f32.mrb[0].mxu0
    %v428 = vadd.f32 0.0, %v427
    %v429 = vpop.f32.mrb[0].mxu0
    %430 = vmatprep.mubr.f32.mxu0 0.0
    %431 = vmatmul.mubr.f32.gmra.mrb[0].mxu0 %v74
    %v432 = vpop.f32.mrb[0].mxu0
    %v433 = vadd.f32 0.0, %v432
    %v434 = vpop.f32.mrb[0].mxu0
    %435 = vmatprep.mubr.f32.mxu0 0.0
    %436 = vmatmul.mubr.f32.gmra.mrb[0].mxu0 %v75
    %v437 = vpop.f32.mrb[0].mxu0
    %v438 = vadd.f32 0.0, %v437
    %v439 = vpop.f32.mrb[0].mxu0
    %440 = vmatprep.mubr.f32.mxu0 0.0
    %441 = vmatmul.mubr.f32.gmra.mrb[0].mxu0 %v76
    %v442 = vpop.f32.mrb[0].mxu0
    %v443 = vadd.f32 0.0, %v442
    %v444 = vpop.f32.mrb[0].mxu0
    %445 = vmatprep.mubr.f32.mxu0 0.0
    %446 = vmatmul.mubr.f32.gmra.mrb[0].mxu0 %v77
    %v447 = vpop.f32.mrb[0].mxu0
    %v448 = vadd.f32 0.0, %v447
    %v449 = vpop.f32.mrb[0].mxu0
    %450 = vmatprep.mubr.f32.mxu0 0.0
    %451 = vmatmul.mubr.f32.gmra.mrb[0].mxu0 %v78
    %v452 = vpop.f32.mrb[0].mxu0
    %v453 = vadd.f32 0.0, %v452
    %v454 = vpop.f32.mrb[0].mxu0
    %455 = vmatprep.mubr.f32.mxu0 0.0
    %456 = vmatmul.mubr.f32.gmra.mrb[0].mxu0 %v79
    %v457 = vpop.f32.mrb[0].mxu0
    %v458 = vadd.f32 0.0, %v457
    %v459 = vpop.f32.mrb[0].mxu0
    %460 = vmatprep.mubr.f32.mxu0 0.0
    %461 = vmatmul.mubr.f32.gmra.mrb[0].mxu0 %v80
    %v462 = vpop.f32.mrb[0].mxu0
    %v463 = vadd.f32 0.0, %v462
    %v464 = vpop.f32.mrb[0].mxu0
    %465 = vmatprep.mubr.f32.mxu0 0.0
    %466 = vmatmul.mubr.f32.gmra.mrb[0].mxu0 %v81
    %v467 = vpop.f32.mrb[0].mxu0
    %v468 = vadd.f32 0.0, %v467
    %v469 = vpop.f32.mrb[0].mxu0
    %470 = vmatprep.mubr.f32.mxu0 0.0
    %471 = vmatmul.mubr.f32.gmra.mrb[0].mxu0 %v82
    %v472 = vpop.f32.mrb[0].mxu0
    %v473 = vadd.f32 0.0, %v472
    %v474 = vpop.f32.mrb[0].mxu0
    %475 = vmatprep.mubr.f32.mxu0 0.0
    %476 = vmatmul.mubr.f32.gmra.mrb[0].mxu0 %v83
    %v477 = vpop.f32.mrb[0].mxu0
    %v478 = vadd.f32 0.0, %v477
    %v479 = vpop.f32.mrb[0].mxu0
    %480 = vmatprep.mubr.f32.mxu0 0.0
    %481 = vmatmul.mubr.f32.gmra.mrb[0].mxu0 %v84
    %v482 = vpop.f32.mrb[0].mxu0
    %v483 = vadd.f32 0.0, %v482
    %v484 = vpop.f32.mrb[0].mxu0
    %485 = vdwg.mxu0
    %v486 = vmax.f32 %v168, 0.0
    %v487 = vmax.f32 %v173, 0.0
    %v488 = vmax.f32 %v178, 0.0
    %v489 = vmax.f32 %v183, 0.0
    %v490 = vmax.f32 %v188, 0.0
    %v491 = vmax.f32 %v193, 0.0
    %v492 = vmax.f32 %v198, 0.0
    %v493 = vmax.f32 %v203, 0.0
    %v494 = vmax.f32 %v208, 0.0
    %v495 = vmax.f32 %v213, 0.0
    %v496 = vmax.f32 %v218, 0.0
    %v497 = vmax.f32 %v223, 0.0
    %v498 = vmax.f32 %v228, 0.0
    %v499 = vmax.f32 %v233, 0.0
    %v500 = vmax.f32 %v238, 0.0
    %v501 = vmax.f32 %v243, 0.0
    %v502 = vmax.f32 %v248, 0.0
    %v503 = vmax.f32 %v253, 0.0
    %v504 = vmax.f32 %v258, 0.0
    %v505 = vmax.f32 %v263, 0.0
    %v506 = vmax.f32 %v268, 0.0
    %v507 = vmax.f32 %v273, 0.0
    %v508 = vmax.f32 %v278, 0.0
    %v509 = vmax.f32 %v283, 0.0
    %v510 = vmax.f32 %v288, 0.0
    %v511 = vmax.f32 %v293, 0.0
    %v512 = vmax.f32 %v298, 0.0
    %v513 = vmax.f32 %v303, 0.0
    %v514 = vmax.f32 %v308, 0.0
    %v515 = vmax.f32 %v313, 0.0
    %v516 = vmax.f32 %v318, 0.0
    %v517 = vmax.f32 %v323, 0.0
    %v518 = vmax.f32 %v328, 0.0
    %v519 = vmax.f32 %v333, 0.0
    %v520 = vmax.f32 %v338, 0.0
    %v521 = vmax.f32 %v343, 0.0
    %v522 = vmax.f32 %v348, 0.0
    %v523 = vmax.f32 %v353, 0.0
    %v524 = vmax.f32 %v358, 0.0
    %v525 = vmax.f32 %v363, 0.0
    %v526 = vmax.f32 %v368, 0.0
    %v527 = vmax.f32 %v373, 0.0
    %v528 = vmax.f32 %v378, 0.0
    %v529 = vmax.f32 %v383, 0.0
    %v530 = vmax.f32 %v388, 0.0
    %v531 = vmax.f32 %v393, 0.0
    %v532 = vmax.f32 %v398, 0.0
    %v533 = vmax.f32 %v403, 0.0
    %v534 = vmax.f32 %v408, 0.0
    %v535 = vmax.f32 %v413, 0.0
    %v536 = vmax.f32 %v418, 0.0
    %v537 = vmax.f32 %v423, 0.0
    %v538 = vmax.f32 %v428, 0.0
    %v539 = vmax.f32 %v433, 0.0
    %v540 = vmax.f32 %v438, 0.0
    %v541 = vmax.f32 %v443, 0.0
    %v542 = vmax.f32 %v448, 0.0
    %v543 = vmax.f32 %v453, 0.0
    %v544 = vmax.f32 %v458, 0.0
    %v545 = vmax.f32 %v463, 0.0
    %v546 = vmax.f32 %v468, 0.0
    %v547 = vmax.f32 %v473, 0.0
    %v548 = vmax.f32 %v478, 0.0
    %v549 = vmax.f32 %v483, 0.0
    %v550 = vld [vmem:[%s2] sm:$0xff]
    %v552 = vcombine.high %v550, %v550
    %v554 = vunpack.c.l.s4 1983009808
    %v555 = vunpack.c.0.s8 %v554
    %v556 = vlaneseq
    %v557 = vshrl.u32 %v556, 7
    %v558 = vsub.s32 %v555, %v557
    %v559 = vrot.slane %v550, %v558
    %v561 = vunpack.c.l.s4 1983009808
    %v562 = vunpack.c.0.s8 %v561
    %v563 = vlaneseq
    %v564 = vshrl.u32 %v563, 7
    %v565 = vsub.s32 %v562, %v564
    %v566 = vrot.slane %v552, %v565
    %v567 = vcombine.high %v559, %v559
    %v568 = vcombine.high %v566, %v566
    %573 = vmatprep.subr.mxu0 0.0
    %574 = vmatpush1.msra.mxu0 %v486
    %575 = vmatprep.subr.mxu0 0.0
    %576 = vmatpush1.msra.mxu0 %v487
    %577 = vmatprep.subr.mxu0 0.0
    %578 = vmatpush1.msra.mxu0 %v488
    %579 = vmatprep.subr.mxu0 0.0
    %580 = vmatpush1.msra.mxu0 %v489
    %581 = vmatprep.subr.mxu0 0.0
    %582 = vmatpush1.msra.mxu0 %v490
    %583 = vmatprep.subr.mxu0 0.0
    %584 = vmatpush1.msra.mxu0 %v491
    %585 = vmatprep.subr.mxu0 0.0
    %586 = vmatpush1.msra.mxu0 %v492
    %587 = vmatprep.subr.mxu0 0.0
    %588 = vmatpush1.msra.mxu0 %v493
    %589 = vmatprep.subr.mxu0 0.0
    %590 = vmatpush1.msra.mxu0 %v494
    %591 = vmatprep.subr.mxu0 0.0
    %592 = vmatpush1.msra.mxu0 %v495
    %593 = vmatprep.subr.mxu0 0.0
    %594 = vmatpush1.msra.mxu0 %v496
    %595 = vmatprep.subr.mxu0 0.0
    %596 = vmatpush1.msra.mxu0 %v497
    %597 = vmatprep.subr.mxu0 0.0
    %598 = vmatpush1.msra.mxu0 %v498
    %599 = vmatprep.subr.mxu0 0.0
    %600 = vmatpush1.msra.mxu0 %v499
    %601 = vmatprep.subr.mxu0 0.0
    %602 = vmatpush1.msra.mxu0 %v500
    %603 = vmatprep.subr.mxu0 0.0
    %604 = vmatpush1.msra.mxu0 %v501
    %605 = vmatprep.subr.mxu0 0.0
    %606 = vmatpush1.msra.mxu0 %v502
    %607 = vmatprep.subr.mxu0 0.0
    %608 = vmatpush1.msra.mxu0 %v503
    %609 = vmatprep.subr.mxu0 0.0
    %610 = vmatpush1.msra.mxu0 %v504
    %611 = vmatprep.subr.mxu0 0.0
    %612 = vmatpush1.msra.mxu0 %v505
    %613 = vmatprep.subr.mxu0 0.0
    %614 = vmatpush1.msra.mxu0 %v506
    %615 = vmatprep.subr.mxu0 0.0
    %616 = vmatpush1.msra.mxu0 %v507
    %617 = vmatprep.subr.mxu0 0.0
    %618 = vmatpush1.msra.mxu0 %v508
    %619 = vmatprep.subr.mxu0 0.0
    %620 = vmatpush1.msra.mxu0 %v509
    %621 = vmatprep.subr.mxu0 0.0
    %622 = vmatpush1.msra.mxu0 %v510
    %623 = vmatprep.subr.mxu0 0.0
    %624 = vmatpush1.msra.mxu0 %v511
    %625 = vmatprep.subr.mxu0 0.0
    %626 = vmatpush1.msra.mxu0 %v512
    %627 = vmatprep.subr.mxu0 0.0
    %628 = vmatpush1.msra.mxu0 %v513
    %629 = vmatprep.subr.mxu0 0.0
    %630 = vmatpush1.msra.mxu0 %v514
    %631 = vmatprep.subr.mxu0 0.0
    %632 = vmatpush1.msra.mxu0 %v515
    %633 = vmatprep.subr.mxu0 0.0
    %634 = vmatpush1.msra.mxu0 %v516
    %635 = vmatprep.subr.mxu0 0.0
    %636 = vmatpush1.msra.mxu0 %v517
    %637 = vmatprep.mubr.f32.mxu0 %v567
    %638 = vmatmul.mubr.f32.gmra.mrb[0].mxu0 %v559
    %v639 = vpop.f32.mrb[0].mxu0
    %v640 = vadd.f32 0.0, %v639
    %v641 = vpop.f32.mrb[0].mxu0
    %642 = vdwg.mxu0
    %643 = vmatprep.subr.mxu0 0.0
    %644 = vmatpush1.msra.mxu0 %v518
    %645 = vmatprep.subr.mxu0 0.0
    %646 = vmatpush1.msra.mxu0 %v519
    %647 = vmatprep.subr.mxu0 0.0
    %648 = vmatpush1.msra.mxu0 %v520
    %649 = vmatprep.subr.mxu0 0.0
    %650 = vmatpush1.msra.mxu0 %v521
    %651 = vmatprep.subr.mxu0 0.0
    %652 = vmatpush1.msra.mxu0 %v522
    %653 = vmatprep.subr.mxu0 0.0
    %654 = vmatpush1.msra.mxu0 %v523
    %655 = vmatprep.subr.mxu0 0.0
    %656 = vmatpush1.msra.mxu0 %v524
    %657 = vmatprep.subr.mxu0 0.0
    %658 = vmatpush1.msra.mxu0 %v525
    %659 = vmatprep.subr.mxu0 0.0
    %660 = vmatpush1.msra.mxu0 %v526
    %661 = vmatprep.subr.mxu0 0.0
    %662 = vmatpush1.msra.mxu0 %v527
    %663 = vmatprep.subr.mxu0 0.0
    %664 = vmatpush1.msra.mxu0 %v528
    %665 = vmatprep.subr.mxu0 0.0
    %666 = vmatpush1.msra.mxu0 %v529
    %667 = vmatprep.subr.mxu0 0.0
    %668 = vmatpush1.msra.mxu0 %v530
    %669 = vmatprep.subr.mxu0 0.0
    %670 = vmatpush1.msra.mxu0 %v531
    %671 = vmatprep.subr.mxu0 0.0
    %672 = vmatpush1.msra.mxu0 %v532
    %673 = vmatprep.subr.mxu0 0.0
    %674 = vmatpush1.msra.mxu0 %v533
    %675 = vmatprep.subr.mxu0 0.0
    %676 = vmatpush1.msra.mxu0 %v534
    %677 = vmatprep.subr.mxu0 0.0
    %678 = vmatpush1.msra.mxu0 %v535
    %679 = vmatprep.subr.mxu0 0.0
    %680 = vmatpush1.msra.mxu0 %v536
    %681 = vmatprep.subr.mxu0 0.0
    %682 = vmatpush1.msra.mxu0 %v537
    %683 = vmatprep.subr.mxu0 0.0
    %684 = vmatpush1.msra.mxu0 %v538
    %685 = vmatprep.subr.mxu0 0.0
    %686 = vmatpush1.msra.mxu0 %v539
    %687 = vmatprep.subr.mxu0 0.0
    %688 = vmatpush1.msra.mxu0 %v540
    %689 = vmatprep.subr.mxu0 0.0
    %690 = vmatpush1.msra.mxu0 %v541
    %691 = vmatprep.subr.mxu0 0.0
    %692 = vmatpush1.msra.mxu0 %v542
    %693 = vmatprep.subr.mxu0 0.0
    %694 = vmatpush1.msra.mxu0 %v543
    %695 = vmatprep.subr.mxu0 0.0
    %696 = vmatpush1.msra.mxu0 %v544
    %697 = vmatprep.subr.mxu0 0.0
    %698 = vmatpush1.msra.mxu0 %v545
    %699 = vmatprep.subr.mxu0 0.0
    %700 = vmatpush1.msra.mxu0 %v546
    %701 = vmatprep.subr.mxu0 0.0
    %702 = vmatpush1.msra.mxu0 %v547
    %703 = vmatprep.subr.mxu0 0.0
    %704 = vmatpush1.msra.mxu0 %v548
    %705 = vmatprep.subr.mxu0 0.0
    %706 = vmatpush1.msra.mxu0 %v549
    %707 = vmatprep.mubr.f32.mxu0 %v568
    %708 = vmatmul.mubr.f32.gmra.mrb[0].mxu0 %v566
    %v709 = vpop.f32.mrb[0].mxu0
    %v710 = vadd.f32 %v640, %v709
    %v711 = vpop.f32.mrb[0].mxu0
    %712 = vdwg.mxu0
    %v713 = vld [vmem:[%s3] sm:$0xff]
    %v714 = vld [vmem:[%s3 + $0x8] sm:$0xff]
    %v715 = vld [vmem:[%s3 + $0x10] sm:$0xff]
    %v716 = vld [vmem:[%s3 + $0x18] sm:$0xff]
    %v717 = vld [vmem:[%s4] sm:$0x1]
    %v719 = vlaneseq
    %v720 = vshrl.u32 %v719, 7
    %v721 = vsub.s32 0, %v720
    %v722 = vrot.slane %v717, %v721
    %vm724 = vcmask 261120
    %v726 = vsel %vm724, %v710, 0
    %728 = vmatprep.subr.mxu0 0.0
    %729 = vmatpush1.msra.mxu0 %v713
    %730 = vmatprep.subr.mxu0 0.0
    %731 = vmatpush1.msra.mxu0 %v714
    %732 = vmatprep.subr.mxu0 0.0
    %733 = vmatpush1.msra.mxu0 %v715
    %734 = vmatprep.subr.mxu0 0.0
    %735 = vmatpush1.msra.mxu0 %v716
    %736 = vmatprep.subr.mxu0 0.0
    %737 = vmatpush1.msra.mxu0 0.0
    %738 = vmatprep.subr.mxu0 0.0
    %739 = vmatpush1.msra.mxu0 0.0
    %740 = vmatprep.subr.mxu0 0.0
    %741 = vmatpush1.msra.mxu0 0.0
    %742 = vmatprep.subr.mxu0 0.0
    %743 = vmatpush1.msra.mxu0 0.0
    %744 = vmatprep.subr.mxu0 0.0
    %745 = vmatpush1.msra.mxu0 0.0
    %746 = vmatprep.subr.mxu0 0.0
    %747 = vmatpush1.msra.mxu0 0.0
    %748 = vmatprep.subr.mxu0 0.0
    %749 = vmatpush1.msra.mxu0 0.0
    %750 = vmatprep.subr.mxu0 0.0
    %751 = vmatpush1.msra.mxu0 0.0
    %752 = vmatprep.subr.mxu0 0.0
    %753 = vmatpush1.msra.mxu0 0.0
    %754 = vmatprep.subr.mxu0 0.0
    %755 = vmatpush1.msra.mxu0 0.0
    %756 = vmatprep.subr.mxu0 0.0
    %757 = vmatpush1.msra.mxu0 0.0
    %758 = vmatprep.subr.mxu0 0.0
    %759 = vmatpush1.msra.mxu0 0.0
    %760 = vmatprep.subr.mxu0 0.0
    %761 = vmatpush1.msra.mxu0 0.0
    %762 = vmatprep.subr.mxu0 0.0
    %763 = vmatpush1.msra.mxu0 0.0
    %764 = vmatprep.subr.mxu0 0.0
    %765 = vmatpush1.msra.mxu0 0.0
    %766 = vmatprep.subr.mxu0 0.0
    %767 = vmatpush1.msra.mxu0 0.0
    %768 = vmatprep.subr.mxu0 0.0
    %769 = vmatpush1.msra.mxu0 0.0
    %770 = vmatprep.subr.mxu0 0.0
    %771 = vmatpush1.msra.mxu0 0.0
    %772 = vmatprep.subr.mxu0 0.0
    %773 = vmatpush1.msra.mxu0 0.0
    %774 = vmatprep.subr.mxu0 0.0
    %775 = vmatpush1.msra.mxu0 0.0
    %776 = vmatprep.subr.mxu0 0.0
    %777 = vmatpush1.msra.mxu0 0.0
    %778 = vmatprep.subr.mxu0 0.0
    %779 = vmatpush1.msra.mxu0 0.0
    %780 = vmatprep.subr.mxu0 0.0
    %781 = vmatpush1.msra.mxu0 0.0
    %782 = vmatprep.subr.mxu0 0.0
    %783 = vmatpush1.msra.mxu0 0.0
    %784 = vmatprep.subr.mxu0 0.0
    %785 = vmatpush1.msra.mxu0 0.0
    %786 = vmatprep.subr.mxu0 0.0
    %787 = vmatpush1.msra.mxu0 0.0
    %788 = vmatprep.subr.mxu0 0.0
    %789 = vmatpush1.msra.mxu0 0.0
    %790 = vmatprep.subr.mxu0 0.0
    %791 = vmatpush1.msra.mxu0 0.0
    %792 = vmatprep.mubr.f32.mxu0 0.0
    %793 = vmatmul.mubr.f32.gmra.mrb[0].mxu0 %v726
    %v794 = vpop.f32.mrb[0].mxu0
    %v795 = vadd.f32 %v722, %v794
    %v796 = vpop.f32.mrb[0].mxu0
    %797 = vdwg.mxu0
    %798 = vst [vmem:[#allocation2] sm:$0x3] %v795
    // Predicated region
    $region22: #{transform_metric_model.1} parent=1 // pred_check
      _
    $region23: #{transform_metric_model.1} parent=1 // pred_check_branch
      %800 = sbr.rel (0) target = $region25
    $region24: #{transform_metric_model.1} parent=1 // pred_region
      %s802 = ssub.s32 32, 32
      %803 = vsyncadd [#allocation3], %s802
      %s805 = sshll.u32 [#allocation2], 4
      %s806 = int_to_ptr.vmem [resolvable:$true] %s805
      %808 = dma.vmem_to_hbm [thread:$0]  %s806, 32, %s5, [#allocation3]
    $region25: #{transform_metric_model.1} parent=1 // pred_fallthru
      _
    // Predicated region
    $region26: #{transform_metric_model.1} parent=1 // pred_check
      _
    $region27: #{transform_metric_model.1} parent=1 // pred_check_branch
      %810 = sbr.rel (0) target = $region29
    $region28: #{transform_metric_model.1} parent=1 // pred_region
      %811 = dma.done [#allocation3], 32
    $region29: #{transform_metric_model.1} parent=1 // pred_fallthru
      _
    %812 = vsyncpa [#allocation3], 1

</llo_original>
